<compile_context>
chip_gen: v6e
topology: v6e:2x2x1
jax: 0.10.0
libtpu: 0.0.40
codegen_flags: <defaults>
</compile_context>

<pallas_src>
import jax
import jax.numpy as jnp
from jax.experimental import pallas as pl
from jax.experimental.pallas import tpu as pltpu


def _round_up(x, m):
    return ((x + m - 1) // m) * m


def _cdiv(a, b):
    return -(-a // b)


def _pad2(a, shape, dtype):
    out = jnp.zeros(shape, dtype)
    return out.at[: a.shape[0], : a.shape[1]].set(a.astype(dtype))


def fcn_kernel(x_ref, w1_ref, b1_ref, w2_ref, b2_ref, o_ref):
    # f32 -> bf16 cast of the activation tile happens here (cheap VPU work,
    # hidden under the MXU/DMA) instead of as a separate XLA pass.
    x = x_ref[...].astype(jnp.bfloat16)
    # Layer 1: bf16 MXU matmul, fp32 accumulate; bias + ReLU in fp32 on VPU.
    h = jnp.dot(x, w1_ref[...], preferred_element_type=jnp.float32)
    h = jnp.maximum(h + b1_ref[...], 0.0)
    # Layer 2: downcast activations to bf16 for the MXU, accumulate in fp32.
    out = jnp.dot(h.astype(jnp.bfloat16), w2_ref[...],
                  preferred_element_type=jnp.float32)
    o_ref[...] = (out + b2_ref[...]).astype(o_ref.dtype)


def prepare_params(w1, b1, w2, b2):
    """One-time prep: pad hidden/class dims to 128 (lane-dense) and cast the
    weights to bf16. Do this once, not per forward call."""
    D_in, H = w1.shape
    C = w2.shape[1]
    H_pad = _round_up(H, 128)
    C_pad = _round_up(C, 128)
    # W1 keeps its true input dim (x is passed unpadded); only the hidden /
    # class dims are zero-padded, which is exact (padded hidden units see
    # bias 0 -> relu(0)=0, padded W2 rows are 0, padded class cols sliced).
    w1p = _pad2(w1, (D_in, H_pad), jnp.bfloat16)
    w2p = _pad2(w2, (H_pad, C_pad), jnp.bfloat16)
    b1p = _pad2(b1.reshape(1, -1), (1, H_pad), jnp.float32)
    b2p = _pad2(b2.reshape(1, -1), (1, C_pad), jnp.float32)
    return {
        "w1": w1p, "b1": b1p, "w2": w2p, "b2": b2p,
        "D_in": D_in, "H": H, "C": C, "H_pad": H_pad, "C_pad": C_pad,
    }


def _choose_batch_tile(B, max_batch_tile):
    """Batch tile: multiple of 8 (f32 sublane), sized so the grid covers B
    tightly and (when the batch allows) has >= 2 steps for v7x's two
    TensorCores and DMA/compute pipelining."""
    B8 = _round_up(B, 8)
    n_tiles = _cdiv(B8, max_batch_tile)
    if n_tiles < 2 and B8 >= 16:
        n_tiles = 2
    tb = _round_up(_cdiv(B8, n_tiles), 8)
    return min(tb, _round_up(B, 8))


def _vmem_bytes_estimate(TB, D_in, H_pad, C_pad):
    # Conservative: assume everything is double-buffered.
    weights = D_in * H_pad * 2 + H_pad * C_pad * 2 + (H_pad + C_pad) * 4
    x_tiles = 2 * TB * D_in * 4
    o_tiles = 2 * TB * C_pad * 4
    return 2 * weights + x_tiles + o_tiles


_VMEM_LIMIT = 48 * 1024 * 1024  # below v7x's 64 MiB physical VMEM


def fcn_forward(x, params, *, max_batch_tile=512):
    """x: (B, D_in) f32; params: output of prepare_params.

    Returns (B, C) f32, equal to relu(x @ w1 + b1) @ w2 + b2 computed with
    bf16 MXU inputs and fp32 accumulation.
    """
    B, D_in = x.shape
    assert D_in == params["D_in"], (D_in, params["D_in"])
    w1p, b1p, w2p, b2p = params["w1"], params["b1"], params["w2"], params["b2"]
    H_pad, C_pad, C = params["H_pad"], params["C_pad"], params["C"]

    TB = _choose_batch_tile(B, max_batch_tile)
    grid = (_cdiv(B, TB),)

    est = _vmem_bytes_estimate(TB, D_in, H_pad, C_pad)
    if est > 40 * 1024 * 1024:
        # TODO(synk): K-tiled fallback (reduction grid axis marked "arbitrary"
        # with an fp32 accumulator scratch) for weights too large to keep
        # VMEM-resident on v7x (64 MiB). Not reachable at UCI-HAR MLP sizes.
        raise NotImplementedError(
            f"weights too large for VMEM-resident design ({est} bytes)")

    out_padded = pl.pallas_call(
        fcn_kernel,
        out_shape=jax.ShapeDtypeStruct((B, C_pad), jnp.float32),
        grid_spec=pltpu.PrefetchScalarGridSpec(
            num_scalar_prefetch=0,
            grid=grid,
            in_specs=[
                # x: tiled over batch, full (unpadded) feature dim.
                pl.BlockSpec((TB, D_in), lambda i: (i, 0)),
                # Weights / biases: constant block -> stay VMEM-resident.
                pl.BlockSpec((D_in, H_pad), lambda i: (0, 0)),
                pl.BlockSpec((1, H_pad), lambda i: (0, 0)),
                pl.BlockSpec((H_pad, C_pad), lambda i: (0, 0)),
                pl.BlockSpec((1, C_pad), lambda i: (0, 0)),
            ],
            out_specs=pl.BlockSpec((TB, C_pad), lambda i: (i, 0)),
        ),
        compiler_params=pltpu.CompilerParams(
            dimension_semantics=("parallel",),
            vmem_limit_bytes=_VMEM_LIMIT,
        ),
    )(x, w1p, b1p, w2p, b2p)

    # Drop the zero-padded class columns (padded batch rows are never written
    # thanks to masked boundary blocks, so no batch slice is needed).
    return out_padded[:, :C]


def init_params(key, input_size, hidden_size, num_classes):
    """PyTorch-style uniform(-1/sqrt(fan_in), 1/sqrt(fan_in)) init.

    Weights are stored as (in_features, out_features) == transpose of torch's
    (out, in); biases are 1-D like torch.
    """
    k1, k2, k3, k4 = jax.random.split(key, 4)
    bound1 = 1.0 / (input_size ** 0.5)
    bound2 = 1.0 / (hidden_size ** 0.5)
    w1 = jax.random.uniform(k1, (input_size, hidden_size), jnp.float32,
                            minval=-bound1, maxval=bound1)
    b1 = jax.random.uniform(k2, (hidden_size,), jnp.float32,
                            minval=-bound1, maxval=bound1)
    w2 = jax.random.uniform(k3, (hidden_size, num_classes), jnp.float32,
                            minval=-bound2, maxval=bound2)
    b2 = jax.random.uniform(k4, (num_classes,), jnp.float32,
                            minval=-bound2, maxval=bound2)
    return w1, b1, w2, b2


if __name__ == "__main__":
    # Small UCI-HAR-style MLP shapes.
    batch, input_size, hidden_size, num_classes = 8, 64, 32, 6

    key = jax.random.PRNGKey(0)
    kx, kp = jax.random.split(key)
    x = jax.random.normal(kx, (batch, input_size), jnp.float32)
    w1, b1, w2, b2 = init_params(kp, input_size, hidden_size, num_classes)

    # One-time weight prep (pad + bf16 cast) outside the per-call forward.
    params = prepare_params(w1, b1, w2, b2)

    out = fcn_forward(x, params)
    jax.block_until_ready(out)
    assert out.shape == (batch, num_classes)

    # fp32 reference (kernel uses bf16 MXU inputs with fp32 accumulation,
    # so tolerance is loosened accordingly).
    ref_f32 = jnp.maximum(x @ w1 + b1, 0.0) @ w2 + b2
    assert jnp.allclose(out, ref_f32, atol=2e-2, rtol=2e-2), (
        jnp.max(jnp.abs(out - ref_f32)))

    # bf16-consistent reference (tight check on the exact computation).
    h_ref = jnp.maximum(
        jnp.dot(x.astype(jnp.bfloat16), w1.astype(jnp.bfloat16),
                preferred_element_type=jnp.float32) + b1, 0.0)
    ref_bf16 = jnp.dot(h_ref.astype(jnp.bfloat16), w2.astype(jnp.bfloat16),
                       preferred_element_type=jnp.float32) + b2
    assert jnp.allclose(out, ref_bf16, atol=1e-4, rtol=1e-4), (
        jnp.max(jnp.abs(out - ref_bf16)))

    print("KERNEL_OK")
</pallas_src>

<mosaic_0001>
module attributes {stable_mosaic.version = 11 : i64} {
  func.func @fcn_kernel(%arg0: i32, %arg1: memref<8x64xf32, #tpu.memory_space<vmem>>, %arg2: memref<64x128xbf16, #tpu.memory_space<vmem>>, %arg3: memref<1x128xf32, #tpu.memory_space<vmem>>, %arg4: memref<128x128xbf16, #tpu.memory_space<vmem>>, %arg5: memref<1x128xf32, #tpu.memory_space<vmem>>, %arg6: memref<8x128xf32, #tpu.memory_space<vmem>>) attributes {dimension_semantics = [#tpu.dimension_semantics<parallel>], iteration_bounds = array<i64: 1>, scalar_prefetch = 0 : i64, scratch_operands = 0 : i64, tpu.core_type = #tpu.core_type<tc>, window_params = [{transform_indices = @transform_0, window_bounds = array<i64: 8, 64>}, {pipeline_mode = #tpu.pipeline_mode<synchronous>, transform_indices = @transform_1, window_bounds = array<i64: 64, 128>}, {pipeline_mode = #tpu.pipeline_mode<synchronous>, transform_indices = @transform_2, window_bounds = array<i64: 1, 128>}, {pipeline_mode = #tpu.pipeline_mode<synchronous>, transform_indices = @transform_3, window_bounds = array<i64: 128, 128>}, {pipeline_mode = #tpu.pipeline_mode<synchronous>, transform_indices = @transform_4, window_bounds = array<i64: 1, 128>}, {transform_indices = @transform_5, window_bounds = array<i64: 8, 128>}]} {
    %c0 = arith.constant 0 : index
    %c0_0 = arith.constant 0 : index
    %0 = vector.load %arg1[%c0, %c0_0] : memref<8x64xf32, #tpu.memory_space<vmem>>, vector<8x64xf32>
    %1 = arith.truncf %0 : vector<8x64xf32> to vector<8x64xbf16>
    %c0_1 = arith.constant 0 : index
    %c0_2 = arith.constant 0 : index
    %2 = vector.load %arg2[%c0_1, %c0_2] : memref<64x128xbf16, #tpu.memory_space<vmem>>, vector<64x128xbf16>
    %cst = arith.constant dense<0.000000e+00> : vector<8x128xf32>
    %3 = tpu.matmul %1, %2, %cst {dimension_numbers = #tpu.dot_dimension_numbers<[1], [0], [0], [1], [0, 0, 1, 1], [], []>} : vector<8x64xbf16>, vector<64x128xbf16>, vector<8x128xf32> -> vector<8x128xf32>
    %c0_3 = arith.constant 0 : index
    %c0_4 = arith.constant 0 : index
    %4 = vector.load %arg3[%c0_3, %c0_4] : memref<1x128xf32, #tpu.memory_space<vmem>>, vector<1x128xf32>
    %5 = vector.broadcast %4 : vector<1x128xf32> to vector<8x128xf32>
    %6 = arith.addf %3, %5 : vector<8x128xf32>
    %cst_5 = arith.constant 0.000000e+00 : f32
    %7 = vector.broadcast %cst_5 : f32 to vector<8x128xf32>
    %8 = arith.maximumf %6, %7 : vector<8x128xf32>
    %9 = arith.truncf %8 : vector<8x128xf32> to vector<8x128xbf16>
    %c0_6 = arith.constant 0 : index
    %c0_7 = arith.constant 0 : index
    %10 = vector.load %arg4[%c0_6, %c0_7] : memref<128x128xbf16, #tpu.memory_space<vmem>>, vector<128x128xbf16>
    %cst_8 = arith.constant dense<0.000000e+00> : vector<8x128xf32>
    %11 = tpu.matmul %9, %10, %cst_8 {dimension_numbers = #tpu.dot_dimension_numbers<[1], [0], [0], [1], [0, 0, 1, 1], [], []>} : vector<8x128xbf16>, vector<128x128xbf16>, vector<8x128xf32> -> vector<8x128xf32>
    %c0_9 = arith.constant 0 : index
    %c0_10 = arith.constant 0 : index
    %12 = vector.load %arg5[%c0_9, %c0_10] : memref<1x128xf32, #tpu.memory_space<vmem>>, vector<1x128xf32>
    %13 = vector.broadcast %12 : vector<1x128xf32> to vector<8x128xf32>
    %14 = arith.addf %11, %13 : vector<8x128xf32>
    %c0_11 = arith.constant 0 : index
    %c0_12 = arith.constant 0 : index
    %15 = vector.load %arg6[%c0_11, %c0_12] : memref<8x128xf32, #tpu.memory_space<vmem>>, vector<8x128xf32>
    tpu.vector_store %arg6[%c0_11, %c0_12], %14 {strides = array<i32>} : memref<8x128xf32, #tpu.memory_space<vmem>>, vector<8x128xf32>,
    return
  }
  func.func @transform_0(%arg0: i32) -> (i32, i32) {
    %c0_i32 = arith.constant 0 : i32
    %c0_i32_0 = arith.constant 0 : i32
    return %arg0, %c0_i32 : i32, i32
  }
  func.func @transform_1(%arg0: i32) -> (i32, i32) {
    %c0_i32 = arith.constant 0 : i32
    %c0_i32_0 = arith.constant 0 : i32
    %c0_i32_1 = arith.constant 0 : i32
    return %c0_i32, %c0_i32_0 : i32, i32
  }
  func.func @transform_2(%arg0: i32) -> (i32, i32) {
    %c0_i32 = arith.constant 0 : i32
    %c0_i32_0 = arith.constant 0 : i32
    %c0_i32_1 = arith.constant 0 : i32
    return %c0_i32, %c0_i32_0 : i32, i32
  }
  func.func @transform_3(%arg0: i32) -> (i32, i32) {
    %c0_i32 = arith.constant 0 : i32
    %c0_i32_0 = arith.constant 0 : i32
    %c0_i32_1 = arith.constant 0 : i32
    return %c0_i32, %c0_i32_0 : i32, i32
  }
  func.func @transform_4(%arg0: i32) -> (i32, i32) {
    %c0_i32 = arith.constant 0 : i32
    %c0_i32_0 = arith.constant 0 : i32
    %c0_i32_1 = arith.constant 0 : i32
    return %c0_i32, %c0_i32_0 : i32, i32
  }
  func.func @transform_5(%arg0: i32) -> (i32, i32) {
    %c0_i32 = arith.constant 0 : i32
    %c0_i32_0 = arith.constant 0 : i32
    return %arg0, %c0_i32 : i32, i32
  }
}

</mosaic_0001>

<llo_original>
// kernel: tpu_custom_call.1
$region0: #{tpu_custom_call.1}
  #allocation0 [shape = 'u32[]', space=smem, size = 0x4, offset = 0x4, fixed_abs, tag = 'smem constant byte address 0x4 - core index']
  #allocation1 [shape = 'u32[144,128]{1,0:T(1,128)}', space=vmem, size = 0x12000, scoped, tag = 'internal scratch']
  %s0 = inlined_call_operand.hbm [shape: f32[8,64], index: 0, kind: input, shape index: {}]
  %s1 = inlined_call_operand.hbm [shape: bf16[64,128], index: 1, kind: input, shape index: {}]
  %s2 = inlined_call_operand.vmem [shape: f32[1,128], index: 2, kind: input, shape index: {}]
  %s3 = inlined_call_operand.hbm [shape: bf16[128,128], index: 3, kind: input, shape index: {}]
  %s4 = inlined_call_operand.vmem [shape: f32[1,128], index: 4, kind: input, shape index: {}]
  %s5 = inlined_call_operand.hbm [shape: f32[8,128], index: 5, kind: output, shape index: {}]
  %s6 = sld [smem:[#allocation0]]
  $region42: #{tpu_custom_call.1} parent=0
    _
  %s8 = ssub.s32 1, %s6
  %s9 = scalar_select 0, %s8, %s6
  $region1: #{tpu_custom_call.1} parent=0
    #allocation2 [shape = 'u8[4096]{0}', space=vmem, size = 0x1000, scoped, tag = 'input window, operand 0, single buffered']
    #allocation3 [shape = 's32[1]{0}', space=sflag, size = 0x4, scoped, tag = 'scoped memory for tpu_custom_call.1']
    #allocation4 [shape = 's32[1]{0}', space=sflag, size = 0x4, scoped, tag = 'scoped memory for tpu_custom_call.1']
    #allocation5 [shape = 'u8[16384]{0}', space=vmem, size = 0x4000, scoped, tag = 'input window, operand 1, single buffered']
    #allocation6 [shape = 's32[1]{0}', space=sflag, size = 0x4, scoped, tag = 'scoped memory for tpu_custom_call.1']
    #allocation7 [shape = 'u8[32768]{0}', space=vmem, size = 0x8000, scoped, tag = 'input window, operand 3, single buffered']
    #allocation8 [shape = 'u8[4096]{0}', space=vmem, size = 0x1000, scoped, tag = 'output window, operand 0, single buffered']
    %10 = vsyncpa [#allocation3], 0
    %11 = vsyncpa [#allocation6], 0
    %12 = vsyncpa [#allocation4], 0
    // Predicated region
    $region2: #{tpu_custom_call.1} parent=1 // pred_check
      _
    $region3: #{tpu_custom_call.1} parent=1 // pred_check_branch
      %14 = sbr.rel (0) target = $region5
    $region4: #{tpu_custom_call.1} parent=1 // pred_region
      %s16 = ssub.s32 128, 128
      %17 = vsyncadd [#allocation3], %s16
      %s19 = sshll.u32 [#allocation2], 4
      %s20 = int_to_ptr.vmem [resolvable:$true] %s19
      %22 = dma.hbm_to_vmem [thread:$0]  %s0, 128, %s20, [#allocation3]
    $region5: #{tpu_custom_call.1} parent=1 // pred_fallthru
      _
    // Predicated region
    $region6: #{tpu_custom_call.1} parent=1 // pred_check
      _
    $region7: #{tpu_custom_call.1} parent=1 // pred_check_branch
      %24 = sbr.rel (0) target = $region9
    $region8: #{tpu_custom_call.1} parent=1 // pred_region
      %s26 = ssub.s32 512, 512
      %27 = vsyncadd [#allocation6], %s26
      %s28 = sshll.u32 [#allocation5], 4
      %s29 = int_to_ptr.vmem [resolvable:$true] %s28
      %34 = dma.hbm_to_vmem [thread:$0]  %s1, 512, %s29, [#allocation6], 64, 64, 4
    $region9: #{tpu_custom_call.1} parent=1 // pred_fallthru
      _
    // Predicated region
    $region10: #{tpu_custom_call.1} parent=1 // pred_check
      _
    $region11: #{tpu_custom_call.1} parent=1 // pred_check_branch
      %36 = sbr.rel (0) target = $region13
    $region12: #{tpu_custom_call.1} parent=1 // pred_region
      _
    $region13: #{tpu_custom_call.1} parent=1 // pred_fallthru
      _
    // Predicated region
    $region14: #{tpu_custom_call.1} parent=1 // pred_check
      _
    $region15: #{tpu_custom_call.1} parent=1 // pred_check_branch
      %38 = sbr.rel (0) target = $region17
    $region16: #{tpu_custom_call.1} parent=1 // pred_region
      %s40 = ssub.s32 1024, 1024
      %41 = vsyncadd [#allocation6], %s40
      %s42 = sshll.u32 [#allocation7], 4
      %s43 = int_to_ptr.vmem [resolvable:$true] %s42
      %48 = dma.hbm_to_vmem [thread:$0]  %s3, 1024, %s43, [#allocation6], 64, 64, 4
    $region17: #{tpu_custom_call.1} parent=1 // pred_fallthru
      _
    // Predicated region
    $region18: #{tpu_custom_call.1} parent=1 // pred_check
      _
    $region19: #{tpu_custom_call.1} parent=1 // pred_check_branch
      %50 = sbr.rel (0) target = $region21
    $region20: #{tpu_custom_call.1} parent=1 // pred_region
      _
    $region21: #{tpu_custom_call.1} parent=1 // pred_fallthru
      _
    // Predicated region
    $region22: #{tpu_custom_call.1} parent=1 // pred_check
      _
    $region23: #{tpu_custom_call.1} parent=1 // pred_check_branch
      %52 = sbr.rel (0) target = $region25
    $region24: #{tpu_custom_call.1} parent=1 // pred_region
      %53 = dma.done [#allocation3], 128
    $region25: #{tpu_custom_call.1} parent=1 // pred_fallthru
      _
    // Predicated region
    $region26: #{tpu_custom_call.1} parent=1 // pred_check
      _
    $region27: #{tpu_custom_call.1} parent=1 // pred_check_branch
      %55 = sbr.rel (0) target = $region29
    $region28: #{tpu_custom_call.1} parent=1 // pred_region
      %56 = dma.done [#allocation6], 512
    $region29: #{tpu_custom_call.1} parent=1 // pred_fallthru
      _
    // Predicated region
    $region30: #{tpu_custom_call.1} parent=1 // pred_check
      _
    $region31: #{tpu_custom_call.1} parent=1 // pred_check_branch
      %58 = sbr.rel (0) target = $region33
    $region32: #{tpu_custom_call.1} parent=1 // pred_region
      %59 = dma.done [#allocation6], 1024
    $region33: #{tpu_custom_call.1} parent=1 // pred_fallthru
      _
    %v61 = vld [vmem:[#allocation2] sm:$0xff]
    %v62 = vpack.c.bf16 %v61, %v61
    %v63 = vld [vmem:[#allocation5] sm:$0xf]
    %v64 = vld [vmem:[#allocation5 + $0x4] sm:$0xf]
    %v65 = vld [vmem:[#allocation5 + $0x8] sm:$0xf]
    %v66 = vld [vmem:[#allocation5 + $0xc] sm:$0xf]
    %v67 = vld [vmem:[#allocation5 + $0x10] sm:$0xf]
    %v68 = vld [vmem:[#allocation5 + $0x14] sm:$0xf]
    %v69 = vld [vmem:[#allocation5 + $0x18] sm:$0xf]
    %v70 = vld [vmem:[#allocation5 + $0x1c] sm:$0xf]
    %v71 = vld [vmem:[%s2] sm:$0x1]
    %v73 = vlaneseq
    %v74 = vshrl.u32 %v73, 7
    %v75 = vsub.s32 0, %v74
    %v76 = vrot.slane %v71, %v75
    %v86 = vunpack.c.l.b16 %v63
    %v87 = vunpack.c.l.b16 %v64
    %v88 = vunpack.c.l.b16 %v65
    %v89 = vunpack.c.l.b16 %v66
    %v90 = vunpack.c.l.b16 %v67
    %v91 = vunpack.c.l.b16 %v68
    %v92 = vunpack.c.l.b16 %v69
    %v93 = vunpack.c.l.b16 %v70
    %v94 = vpack.c.b16 %v87, %v86
    %v95 = vpack.c.b16 %v89, %v88
    %v96 = vpack.c.b16 %v91, %v90
    %v97 = vpack.c.b16 %v93, %v92
    %vm102 = vcmask 523264
    %v104 = vsel %vm102, %v62, 0
    %106 = vmatprep.subr.bf16.mxu0 0
    %107 = vmatpush1.bf16.msra.mxu0 0
    %108 = vmatprep.subr.bf16.mxu0 0
    %109 = vmatpush1.bf16.msra.mxu0 0
    %110 = vmatprep.subr.bf16.mxu0 0
    %111 = vmatpush1.bf16.msra.mxu0 0
    %112 = vmatprep.subr.bf16.mxu0 0
    %113 = vmatpush1.bf16.msra.mxu0 0
    %114 = vmatprep.subr.bf16.mxu0 0
    %115 = vmatpush1.bf16.msra.mxu0 %v97
    %116 = vmatprep.subr.bf16.mxu0 0
    %117 = vmatpush1.bf16.msra.mxu0 %v96
    %118 = vmatprep.subr.bf16.mxu0 0
    %119 = vmatpush1.bf16.msra.mxu0 %v95
    %120 = vmatprep.subr.bf16.mxu0 0
    %121 = vmatpush1.bf16.msra.mxu0 %v94
    %122 = vmatprep.subr.bf16.mxu0 0
    %123 = vmatpush2.bf16.msra.mxu0 0
    %124 = vmatprep.subr.bf16.mxu0 0
    %125 = vmatpush2.bf16.msra.mxu0 0
    %126 = vmatprep.subr.bf16.mxu0 0
    %127 = vmatpush2.bf16.msra.mxu0 0
    %128 = vmatprep.subr.bf16.mxu0 0
    %129 = vmatpush2.bf16.msra.mxu0 0
    %130 = vmatprep.subr.bf16.mxu0 0
    %131 = vmatpush2.bf16.msra.mxu0 0
    %132 = vmatprep.subr.bf16.mxu0 0
    %133 = vmatpush2.bf16.msra.mxu0 0
    %134 = vmatprep.subr.bf16.mxu0 0
    %135 = vmatpush2.bf16.msra.mxu0 0
    %136 = vmatprep.subr.bf16.mxu0 0
    %137 = vmatpush2.bf16.msra.mxu0 0
    %138 = vmatprep.mubr.bf16.mxu0 0
    %139 = vmatmul.mubr.bf16.gmra.mxu0 %v104
    %v140 = vpop.f32.mrf.mxu0
    %v141 = vadd.f32 %v76, %v140
    %v142 = vpop.f32.mrf.mxu0
    %v143 = vpop.f32.mrf.mxu0
    %v144 = vpop.f32.mrf.mxu0
    %145 = vdwg.mxu0
    %v146 = vmax.f32 %v141, 0.0
    %v147 = vpack.c.bf16 %v146, %v146
    %v148 = vld [vmem:[#allocation7] sm:$0xf]
    %v149 = vld [vmem:[#allocation7 + $0x4] sm:$0xf]
    %v150 = vld [vmem:[#allocation7 + $0x8] sm:$0xf]
    %v151 = vld [vmem:[#allocation7 + $0xc] sm:$0xf]
    %v152 = vld [vmem:[#allocation7 + $0x10] sm:$0xf]
    %v153 = vld [vmem:[#allocation7 + $0x14] sm:$0xf]
    %v154 = vld [vmem:[#allocation7 + $0x18] sm:$0xf]
    %v155 = vld [vmem:[#allocation7 + $0x1c] sm:$0xf]
    %v156 = vld [vmem:[#allocation7 + $0x20] sm:$0xf]
    %v157 = vld [vmem:[#allocation7 + $0x24] sm:$0xf]
    %v158 = vld [vmem:[#allocation7 + $0x28] sm:$0xf]
    %v159 = vld [vmem:[#allocation7 + $0x2c] sm:$0xf]
    %v160 = vld [vmem:[#allocation7 + $0x30] sm:$0xf]
    %v161 = vld [vmem:[#allocation7 + $0x34] sm:$0xf]
    %v162 = vld [vmem:[#allocation7 + $0x38] sm:$0xf]
    %v163 = vld [vmem:[#allocation7 + $0x3c] sm:$0xf]
    %v164 = vld [vmem:[%s4] sm:$0x1]
    %v166 = vlaneseq
    %v167 = vshrl.u32 %v166, 7
    %v168 = vsub.s32 0, %v167
    %v169 = vrot.slane %v164, %v168
    %v187 = vunpack.c.l.b16 %v148
    %v188 = vunpack.c.l.b16 %v149
    %v189 = vunpack.c.l.b16 %v150
    %v190 = vunpack.c.l.b16 %v151
    %v191 = vunpack.c.l.b16 %v152
    %v192 = vunpack.c.l.b16 %v153
    %v193 = vunpack.c.l.b16 %v154
    %v194 = vunpack.c.l.b16 %v155
    %v195 = vunpack.c.l.b16 %v156
    %v196 = vunpack.c.l.b16 %v157
    %v197 = vunpack.c.l.b16 %v158
    %v198 = vunpack.c.l.b16 %v159
    %v199 = vunpack.c.l.b16 %v160
    %v200 = vunpack.c.l.b16 %v161
    %v201 = vunpack.c.l.b16 %v162
    %v202 = vunpack.c.l.b16 %v163
    %v203 = vpack.c.b16 %v188, %v187
    %v204 = vpack.c.b16 %v190, %v189
    %v205 = vpack.c.b16 %v192, %v191
    %v206 = vpack.c.b16 %v194, %v193
    %v207 = vpack.c.b16 %v196, %v195
    %v208 = vpack.c.b16 %v198, %v197
    %v209 = vpack.c.b16 %v200, %v199
    %v210 = vpack.c.b16 %v202, %v201
    %219 = vmatprep.subr.bf16.mxu0 0
    %220 = vmatpush1.bf16.msra.mxu0 %v210
    %221 = vmatprep.subr.bf16.mxu0 0
    %222 = vmatpush1.bf16.msra.mxu0 %v209
    %223 = vmatprep.subr.bf16.mxu0 0
    %224 = vmatpush1.bf16.msra.mxu0 %v208
    %225 = vmatprep.subr.bf16.mxu0 0
    %226 = vmatpush1.bf16.msra.mxu0 %v207
    %227 = vmatprep.subr.bf16.mxu0 0
    %228 = vmatpush1.bf16.msra.mxu0 %v206
    %229 = vmatprep.subr.bf16.mxu0 0
    %230 = vmatpush1.bf16.msra.mxu0 %v205
    %231 = vmatprep.subr.bf16.mxu0 0
    %232 = vmatpush1.bf16.msra.mxu0 %v204
    %233 = vmatprep.subr.bf16.mxu0 0
    %234 = vmatpush1.bf16.msra.mxu0 %v203
    %235 = vmatprep.subr.bf16.mxu0 0
    %236 = vmatpush2.bf16.msra.mxu0 0
    %237 = vmatprep.subr.bf16.mxu0 0
    %238 = vmatpush2.bf16.msra.mxu0 0
    %239 = vmatprep.subr.bf16.mxu0 0
    %240 = vmatpush2.bf16.msra.mxu0 0
    %241 = vmatprep.subr.bf16.mxu0 0
    %242 = vmatpush2.bf16.msra.mxu0 0
    %243 = vmatprep.subr.bf16.mxu0 0
    %244 = vmatpush2.bf16.msra.mxu0 0
    %245 = vmatprep.subr.bf16.mxu0 0
    %246 = vmatpush2.bf16.msra.mxu0 0
    %247 = vmatprep.subr.bf16.mxu0 0
    %248 = vmatpush2.bf16.msra.mxu0 0
    %249 = vmatprep.subr.bf16.mxu0 0
    %250 = vmatpush2.bf16.msra.mxu0 0
    %251 = vmatprep.mubr.bf16.mxu0 0
    %252 = vmatmul.mubr.bf16.gmra.mxu0 %v147
    %v253 = vpop.f32.mrf.mxu0
    %v254 = vadd.f32 %v169, %v253
    %v255 = vpop.f32.mrf.mxu0
    %v256 = vpop.f32.mrf.mxu0
    %v257 = vpop.f32.mrf.mxu0
    %258 = vdwg.mxu0
    %259 = vst [vmem:[#allocation8] sm:$0xff] %v254
    // Predicated region
    $region34: #{tpu_custom_call.1} parent=1 // pred_check
      _
    $region35: #{tpu_custom_call.1} parent=1 // pred_check_branch
      %261 = sbr.rel (0) target = $region37
    $region36: #{tpu_custom_call.1} parent=1 // pred_region
      %s263 = ssub.s32 128, 128
      %264 = vsyncadd [#allocation4], %s263
      %s266 = sshll.u32 [#allocation8], 4
      %s267 = int_to_ptr.vmem [resolvable:$true] %s266
      %269 = dma.vmem_to_hbm [thread:$0]  %s267, 128, %s5, [#allocation4]
    $region37: #{tpu_custom_call.1} parent=1 // pred_fallthru
      _
    // Predicated region
    $region38: #{tpu_custom_call.1} parent=1 // pred_check
      _
    $region39: #{tpu_custom_call.1} parent=1 // pred_check_branch
      %271 = sbr.rel (0) target = $region41
    $region40: #{tpu_custom_call.1} parent=1 // pred_region
      %272 = dma.done [#allocation4], 128
    $region41: #{tpu_custom_call.1} parent=1 // pred_fallthru
      _
    %273 = vsyncpa [#allocation3], 1
    %274 = vsyncpa [#allocation6], 1
    %275 = vsyncpa [#allocation4], 1

</llo_original>
